<compile_context>
chip_gen: v5e
topology: v5e:2x2
jax: 0.10.0
libtpu: 0.0.40
codegen_flags: <defaults>
</compile_context>

<pallas_src>
import jax
import jax.numpy as jnp
from jax.experimental import pallas as pl
from jax.experimental.pallas import tpu as pltpu


# ----------------------------------------------------------------------------
# 1. Single-point forward (matches Model.forward semantics)
# ----------------------------------------------------------------------------
def _rosenbrock_point_kernel(p_ref, o_ref):
    # p_ref: SMEM (2,) f32, o_ref: SMEM (1, 1) f32
    x = p_ref[0]
    y = p_ref[1]
    t1 = jnp.float32(1.0) - x
    t2 = y - x * x
    o_ref[0, 0] = t1 * t1 + jnp.float32(100.0) * (t2 * t2)


def model_forward_raw(params: jax.Array) -> jax.Array:
    """Evaluate the objective at `params` (shape (2,), f32) -> (1, 1) f32."""
    return pl.pallas_call(
        _rosenbrock_point_kernel,
        out_shape=jax.ShapeDtypeStruct((1, 1), jnp.float32),
        in_specs=[pl.BlockSpec(memory_space=pltpu.SMEM)],
        out_specs=pl.BlockSpec(memory_space=pltpu.SMEM),
        cost_estimate=pl.CostEstimate(flops=7, transcendentals=0, bytes_accessed=12),
    )(params)


def model_forward(params: jax.Array) -> jax.Array:
    """Scalar result, matching torch's 0-d tensor from Model.forward()."""
    return model_forward_raw(params).reshape(())


# ----------------------------------------------------------------------------
# 2. Batched fused value + analytic gradient: all K optimizer trajectories in
#    ONE lane-parallel VPU launch (amortizes dispatch K-fold per step).
# ----------------------------------------------------------------------------
def _rosenbrock_batched_vg_kernel(x_ref, y_ref, val_ref, gx_ref, gy_ref):
    # All refs are (1, K) f32 in VMEM; points are laid along the lane dim.
    x = x_ref[...]
    y = y_ref[...]
    t1 = 1.0 - x
    t2 = y - x * x
    val_ref[...] = t1 * t1 + 100.0 * (t2 * t2)
    # d/dx = -2(1-x) - 400 x (y - x^2) ;  d/dy = 200 (y - x^2)
    gx_ref[...] = -2.0 * t1 - 400.0 * x * t2
    gy_ref[...] = 200.0 * t2


def model_value_and_grad_batched(params: jax.Array):
    """params: (K, 2) f32 -> (values (K,), grads (K, 2)) from one launch."""
    K = params.shape[0]
    x = params[:, 0].reshape(1, K).astype(jnp.float32)
    y = params[:, 1].reshape(1, K).astype(jnp.float32)
    val, gx, gy = pl.pallas_call(
        _rosenbrock_batched_vg_kernel,
        out_shape=(
            jax.ShapeDtypeStruct((1, K), jnp.float32),
            jax.ShapeDtypeStruct((1, K), jnp.float32),
            jax.ShapeDtypeStruct((1, K), jnp.float32),
        ),
        cost_estimate=pl.CostEstimate(
            flops=14 * K, transcendentals=0, bytes_accessed=20 * K
        ),
    )(x, y)
    grad = jnp.stack([gx[0], gy[0]], axis=-1)  # (K, 2)
    return val[0], grad


# ----------------------------------------------------------------------------
# 3. Heatmap/contour grid evaluation: output-only HBM traffic.  The kernel
#    receives a (1, tn) row of x values and a (tm, 1) column of y values and
#    broadcasts them on the VPU; only the (tm, tn) result is streamed back.
# ----------------------------------------------------------------------------
def _rosenbrock_grid_kernel(xs_ref, ys_ref, o_ref):
    x = xs_ref[...]                      # (1, tn)
    y = ys_ref[...]                      # (tm, 1)
    t1 = 1.0 - x                         # (1, tn)
    t2 = y - x * x                       # (tm, tn) via broadcast
    o_ref[...] = t1 * t1 + 100.0 * (t2 * t2)


def rosenbrock_grid(xs: jax.Array, ys: jax.Array, *, tm: int = 512, tn: int = 512) -> jax.Array:
    """Evaluate f over the (M, N) grid implied by 1-D vectors ys (M,) / xs (N,).

    Z[i, j] = f(xs[j], ys[i])  (same orientation as jnp.meshgrid(xs, ys)).
    Default 512x512 f32 tiles (1 MiB output block, 2 MiB double-buffered)
    stay well under the v7x 32 MiB scoped-VMEM default; larger grids get
    multiple 'parallel' blocks so both v7x TensorCores are used.
    """
    N = xs.shape[0]
    M = ys.shape[0]
    tm = min(tm, M)
    tn = min(tn, N)
    x_row = xs.reshape(1, N).astype(jnp.float32)
    y_col = ys.reshape(M, 1).astype(jnp.float32)
    n_elem = M * N
    return pl.pallas_call(
        _rosenbrock_grid_kernel,
        out_shape=jax.ShapeDtypeStruct((M, N), jnp.float32),
        grid_spec=pltpu.PrefetchScalarGridSpec(
            num_scalar_prefetch=0,
            grid=(pl.cdiv(M, tm), pl.cdiv(N, tn)),
            in_specs=[
                pl.BlockSpec((1, tn), lambda i, j: (0, j)),
                pl.BlockSpec((tm, 1), lambda i, j: (i, 0)),
            ],
            out_specs=pl.BlockSpec((tm, tn), lambda i, j: (i, j)),
        ),
        compiler_params=pltpu.CompilerParams(
            dimension_semantics=("parallel", "parallel"),
        ),
        cost_estimate=pl.CostEstimate(
            flops=7 * n_elem,
            transcendentals=0,
            bytes_accessed=4 * (n_elem + M + N),   # output-only + tiny axis vectors
        ),
    )(x_row, y_col)


# ----------------------------------------------------------------------------
# Pure-JAX references
# ----------------------------------------------------------------------------
def _rosenbrock_ref(p: jax.Array) -> jax.Array:
    x, y = p[0], p[1]
    return (1.0 - x) ** 2 + 100.0 * (y - x * x) ** 2


if __name__ == "__main__":
    key = jax.random.PRNGKey(0)
    k1, k2 = jax.random.split(key)

    # --- 1. single-point forward (Model.forward semantics) ------------------
    initial_state = jax.random.uniform(k1, (2,), jnp.float32, -2.0, 2.0)
    result = jax.block_until_ready(model_forward(initial_state))
    expected = _rosenbrock_ref(initial_state)
    assert jnp.allclose(result, expected, rtol=1e-5, atol=1e-5), (result, expected)

    # --- 2. batched value + grad: K optimizer trajectories, one launch ------
    K = 6
    params0 = jax.random.uniform(k2, (K, 2), jnp.float32, -2.0, 2.0)
    val, grad = model_value_and_grad_batched(params0)
    val = jax.block_until_ready(val)
    grad = jax.block_until_ready(grad)
    ref_val = jax.vmap(_rosenbrock_ref)(params0)
    ref_grad = jax.vmap(jax.grad(_rosenbrock_ref))(params0)
    assert jnp.allclose(val, ref_val, rtol=1e-5, atol=1e-4), (val, ref_val)
    assert jnp.allclose(grad, ref_grad, rtol=1e-4, atol=1e-3), (grad, ref_grad)

    # Jitted SGD loop: one Pallas launch per step for ALL K trajectories.
    lr = 1e-4
    n_steps = 3

    @jax.jit
    def run_pallas(p):
        def body(_, p):
            _, g = model_value_and_grad_batched(p)
            return p - lr * g
        return jax.lax.fori_loop(0, n_steps, body, p)

    @jax.jit
    def run_ref(p):
        def body(_, p):
            g = jax.vmap(jax.grad(_rosenbrock_ref))(p)
            return p - lr * g
        return jax.lax.fori_loop(0, n_steps, body, p)

    p_pallas = jax.block_until_ready(run_pallas(params0))
    p_ref = jax.block_until_ready(run_ref(params0))
    assert jnp.allclose(p_pallas, p_ref, rtol=1e-3, atol=1e-3), (p_pallas, p_ref)

    # --- 3. heatmap grid (output-only HBM traffic, full-array 512x512 tile) -
    M, N = 512, 512
    xs = jnp.linspace(-2.0, 2.0, N, dtype=jnp.float32)
    ys = jnp.linspace(-1.0, 3.0, M, dtype=jnp.float32)
    Z = jax.block_until_ready(rosenbrock_grid(xs, ys))
    Xg, Yg = jnp.meshgrid(xs, ys)
    Z_ref = (1.0 - Xg) ** 2 + 100.0 * (Yg - Xg * Xg) ** 2
    assert jnp.allclose(Z, Z_ref, rtol=1e-5, atol=1e-3), float(jnp.max(jnp.abs(Z - Z_ref)))

    print("KERNEL_OK")
</pallas_src>

<mosaic_0001>
module attributes {stable_mosaic.version = 11 : i64} {
  func.func @_rosenbrock_point_kernel(%arg0: memref<2xf32, #tpu.memory_space<smem>>, %arg1: memref<1x1xf32, #tpu.memory_space<smem>>) attributes {dimension_semantics = [], scalar_prefetch = 0 : i64, scratch_operands = 0 : i64, tpu.core_type = #tpu.core_type<tc>} {
    %c0 = arith.constant 0 : index
    %0 = memref.load %arg0[%c0] : memref<2xf32, #tpu.memory_space<smem>>
    %c1 = arith.constant 1 : index
    %1 = memref.load %arg0[%c1] : memref<2xf32, #tpu.memory_space<smem>>
    %cst = arith.constant 1.000000e+00 : f32
    %2 = arith.subf %cst, %0 : f32
    %3 = arith.mulf %0, %0 : f32
    %4 = arith.subf %1, %3 : f32
    %5 = arith.mulf %2, %2 : f32
    %6 = arith.mulf %4, %4 : f32
    %cst_0 = arith.constant 1.000000e+02 : f32
    %7 = arith.mulf %cst_0, %6 : f32
    %8 = arith.addf %5, %7 : f32
    %c0_1 = arith.constant 0 : index
    %c0_2 = arith.constant 0 : index
    %9 = memref.load %arg1[%c0_1, %c0_2] : memref<1x1xf32, #tpu.memory_space<smem>>
    memref.store %8, %arg1[%c0_1, %c0_2] : memref<1x1xf32, #tpu.memory_space<smem>>
    return
  }
}

</mosaic_0001>

<llo_original>
// kernel: tpu_custom_call.1
$region0: #{tpu_custom_call.1}
  #allocation0 [shape = 'u32[]', space=smem, size = 0x4, offset = 0x4, fixed_abs, tag = 'smem constant byte address 0x4 - core index']
  #allocation1 [shape = 'u32[72,128]{1,0:T(1,128)}', space=vmem, size = 0x9000, scoped, tag = 'internal scratch']
  %s0 = inlined_call_operand.hbm [shape: f32[2], index: 0, kind: input, shape index: {}]
  %s1 = inlined_call_operand.hbm [shape: f32[1,1], index: 1, kind: output, shape index: {}]
  %s2 = sld [smem:[#allocation0]]
  $region18: #{tpu_custom_call.1} parent=0
    _
  %s4 = ssub.s32 1, %s2
  %s5 = scalar_select 0, %s4, %s2
  $region1: #{tpu_custom_call.1} parent=0
    #allocation2 [shape = 'u8[512]{0}', space=smem, size = 0x200, scoped, tag = 'input window, operand 0, single buffered']
    #allocation3 [shape = 's32[1]{0}', space=sflag, size = 0x4, scoped, tag = 'scoped memory for tpu_custom_call.1']
    #allocation4 [shape = 's32[1]{0}', space=sflag, size = 0x4, scoped, tag = 'scoped memory for tpu_custom_call.1']
    #allocation5 [shape = 'u8[512]{0}', space=smem, size = 0x200, scoped, tag = 'output window, operand 0, single buffered']
    %6 = vsyncpa [#allocation3], 0
    %7 = vsyncpa [#allocation4], 0
    // Predicated region
    $region2: #{tpu_custom_call.1} parent=1 // pred_check
      _
    $region3: #{tpu_custom_call.1} parent=1 // pred_check_branch
      %9 = sbr.rel (0) target = $region5
    $region4: #{tpu_custom_call.1} parent=1 // pred_region
      %11 = vsyncadd [#allocation3], 0
      %s13 = sshll.u32 %s0, 4
      %s14 = int_to_ptr.hbm [resolvable:$true] %s13
      %16 = dma.hbm_to_smem %s14, 16, [#allocation2], [#allocation3]
    $region5: #{tpu_custom_call.1} parent=1 // pred_fallthru
      _
    // Predicated region
    $region6: #{tpu_custom_call.1} parent=1 // pred_check
      _
    $region7: #{tpu_custom_call.1} parent=1 // pred_check_branch
      %18 = sbr.rel (0) target = $region9
    $region8: #{tpu_custom_call.1} parent=1 // pred_region
      %20 = dma.done [#allocation3], 16
    $region9: #{tpu_custom_call.1} parent=1 // pred_fallthru
      _
    %21 = sfence
    %s22 = sld [smem:[#allocation2]]
    %s23 = sld [smem:[#allocation2 + $0x1]]
    %s24 = ssub.f32 1.0, %s22
    %s25 = smul.f32 %s22, %s22
    %s26 = ssub.f32 %s23, %s25
    %s27 = smul.f32 %s24, %s24
    %s28 = smul.f32 %s26, %s26
    %s29 = smul.f32 %s28, 100.0
    %s30 = sadd.f32 %s27, %s29
    %s31 = scalar_lea.smem [#allocation5], 0
    %32 = sst [smem:[%s31]] %s30
    // Predicated region
    $region10: #{tpu_custom_call.1} parent=1 // pred_check
      _
    $region11: #{tpu_custom_call.1} parent=1 // pred_check_branch
      %34 = sbr.rel (0) target = $region13
    $region12: #{tpu_custom_call.1} parent=1 // pred_region
      %36 = vsyncadd [#allocation4], 0
      %s38 = sshll.u32 %s1, 4
      %s39 = int_to_ptr.hbm [resolvable:$true] %s38
      %41 = dma.smem_to_hbm [#allocation5], 16, %s39, [#allocation4]
    $region13: #{tpu_custom_call.1} parent=1 // pred_fallthru
      _
    // Predicated region
    $region14: #{tpu_custom_call.1} parent=1 // pred_check
      _
    $region15: #{tpu_custom_call.1} parent=1 // pred_check_branch
      %43 = sbr.rel (0) target = $region17
    $region16: #{tpu_custom_call.1} parent=1 // pred_region
      %45 = dma.done [#allocation4], 16
    $region17: #{tpu_custom_call.1} parent=1 // pred_fallthru
      _
    %46 = sfence
    %47 = vsyncpa [#allocation3], 1
    %48 = vsyncpa [#allocation4], 1

</llo_original>
